<compile_context>
chip_gen: v7x
topology: tpu7x:2x2x1
jax: 0.10.0
libtpu: 0.0.40
codegen_flags: <defaults>
</compile_context>

<pallas_src>
import functools

import jax
import jax.numpy as jnp
from jax.experimental import pallas as pl
from jax.experimental.pallas import tpu as pltpu


def _round_up(x: int, m: int) -> int:
    return ((x + m - 1) // m) * m


def _round_down(x: int, m: int) -> int:
    return (x // m) * m


def _vmem_need(tm, tn, H, x_it, w_it, cd_it, out_it, b_it):
    return (2 * tm * H * x_it        # x row tile (double-buffered)
            + 2 * tn * H * w_it      # weight slab (double-buffered)
            + tn * H * cd_it         # transposed-weight scratch (single)
            + 2 * tm * tn * out_it   # output tile (double-buffered)
            + 2 * tn * b_it)         # bias tile (tiny)


def lm_head_kernel(x_ref, w_ref, b_ref, o_ref, wt_ref, *, scale):
    # x_ref : (tm, H)   row tile of flattened embeddings
    # w_ref : (tn, H)   vocab slab of the decoder weight (native [V, H] layout)
    # b_ref : (1, tn)   bias tile
    # o_ref : (tm, tn)  output tile
    # wt_ref: (H, tn)   VMEM scratch: transposed (+cast) weight slab

    # Transpose / cast the weight slab once per vocab step.  Rows are the inner
    # ("arbitrary") grid axis, so this fires exactly when a new slab arrives and
    # the result is reused by every row tile of that slab.
    @pl.when(pl.program_id(1) == 0)
    def _():
        wt_ref[...] = w_ref[...].astype(wt_ref.dtype).T

    x = x_ref[...]
    if x.dtype != wt_ref.dtype:          # static (trace-time) decision
        x = x.astype(wt_ref.dtype)       # cheap VMEM-local cast; weight untouched

    acc = jnp.dot(x, wt_ref[...], preferred_element_type=jnp.float32)
    acc = acc + b_ref[...].astype(jnp.float32)
    # `scale` is a module-construction constant; folding it statically is fine
    # (a varying scale would retrace -- acceptable for this head).
    o_ref[...] = (jnp.float32(scale) * acc).astype(o_ref.dtype)


def lm_head(embedding, weight, bias, scale, labels_mask=None, *,
            tm_target=256, tn_cap=2048, out_dtype=None):
    """scores = scale * (embedding @ weight.T + bias)

    embedding: [..., H]; weight: [V, H] (kept in its native dtype/layout);
    bias: [V].  `out_dtype` optionally emits scores in a narrower dtype (e.g.
    bf16) to halve the N*V output HBM stream; defaults to embedding.dtype so the
    numerics/dtype policy matches the PyTorch module.
    """
    if labels_mask is not None:
        # TODO(synk): boolean masking yields a dynamic shape; only usable eagerly
        # (outside jit). Applied in plain JAX before the static-shape kernel.
        embedding = embedding[labels_mask]

    lead = embedding.shape[:-1]
    H = embedding.shape[-1]
    V = weight.shape[0]
    out_dtype = embedding.dtype if out_dtype is None else out_dtype

    x = embedding.reshape(-1, H)
    N = x.shape[0]
    if N == 0:
        return jnp.zeros(lead + (V,), out_dtype)
    b2 = bias.reshape(1, V)

    # ---- dtype policy ------------------------------------------------------
    x_it = jnp.dtype(x.dtype).itemsize
    w_it = jnp.dtype(weight.dtype).itemsize
    compute_dtype = weight.dtype if w_it <= x_it else x.dtype
    cd_it = jnp.dtype(compute_dtype).itemsize
    out_it = jnp.dtype(out_dtype).itemsize
    b_it = jnp.dtype(bias.dtype).itemsize

    # ---- per-generation VMEM budget -----------------------------------------
    try:
        vmem_cap = int(pltpu.get_tpu_info().vmem_capacity_bytes)
    except Exception:  # conservative fallback if the query is unavailable
        vmem_cap = 64 * 1024 * 1024
    budget = (vmem_cap * 7) // 8          # ~112 MiB on v5e/v6e, ~56 MiB on v7x
    slack = 4 * 1024 * 1024               # compiler-internal scratch headroom

    def fits(tm_, tn_):
        return _vmem_need(tm_, tn_, H, x_it, w_it, cd_it, out_it, b_it) <= budget - slack

    # ---- row tile ------------------------------------------------------------
    N8 = _round_up(N, 8)
    V128 = _round_up(V, 128)
    probe_tn = V if V <= 128 else min(512, V128)
    if N8 <= 2048 and fits(N8, probe_tn):
        tm = N                      # whole batch resident: x DMA'd exactly once
    else:
        tm = min(tm_target, N8)     # multiple of 8; partial edge block OK

    # ---- vocab tile (the reuse dimension: grow as far as VMEM allows) --------
    if V <= 128:
        tn = V
    else:
        tn = min(tn_cap, V128)
        while tn > 128 and not fits(tm, tn):
            tn -= 128
    # Last resort for very large H: shrink the row tile (keeps multiple-of-8).
    while not fits(tm, tn) and tm > 8:
        tm = max(8, _round_down(tm // 2, 8))

    grid = (pl.cdiv(V, tn), pl.cdiv(N, tm))   # vocab OUTER, rows INNER

    out = pl.pallas_call(
        functools.partial(lm_head_kernel, scale=float(scale)),
        out_shape=jax.ShapeDtypeStruct((N, V), out_dtype),
        grid_spec=pltpu.PrefetchScalarGridSpec(
            num_scalar_prefetch=0,
            grid=grid,
            in_specs=[
                pl.BlockSpec((tm, H), lambda j, i: (i, 0)),  # x row tile
                pl.BlockSpec((tn, H), lambda j, i: (j, 0)),  # weight slab (reused over i)
                pl.BlockSpec((1, tn), lambda j, i: (0, j)),  # bias tile
            ],
            out_specs=pl.BlockSpec((tm, tn), lambda j, i: (i, j)),
            scratch_shapes=[pltpu.VMEM((H, tn), compute_dtype)],
        ),
        compiler_params=pltpu.CompilerParams(
            # Vocab is the megacore-sharded axis (total weight traffic stays V*H);
            # rows carry the transposed-weight scratch dependency -> "arbitrary".
            dimension_semantics=("parallel", "arbitrary"),
            vmem_limit_bytes=int(budget),
        ),
    )(x, weight, b2)

    return out.reshape(*lead, V)


if __name__ == "__main__":
    batch, seq, hidden, vocab = 2, 8, 128, 256
    scale = 0.5

    key = jax.random.PRNGKey(0)
    k_emb, k_w, k_b = jax.random.split(key, 3)

    embedding = jax.random.normal(k_emb, (batch, seq, hidden), dtype=jnp.float32)

    # Deterministic nn.Linear-style init: U(-1/sqrt(H), 1/sqrt(H))
    bound = 1.0 / float(hidden) ** 0.5
    weight = jax.random.uniform(k_w, (vocab, hidden), jnp.float32, -bound, bound)
    bias = jax.random.uniform(k_b, (vocab,), jnp.float32, -bound, bound)

    scores = lm_head(embedding, weight, bias, scale)
    scores = jax.block_until_ready(scores)

    # Reference check (plain JAX)
    ref = scale * (embedding @ weight.T + bias)
    assert scores.shape == (batch, seq, vocab)
    assert jnp.allclose(scores, ref, atol=1e-5, rtol=1e-5)

    print("KERNEL_OK")
</pallas_src>

<mosaic_0001>
module attributes {stable_mosaic.version = 11 : i64} {
  func.func @lm_head_kernel(%arg0: i32, %arg1: i32, %arg2: memref<16x128xf32, #tpu.memory_space<vmem>>, %arg3: memref<256x128xf32, #tpu.memory_space<vmem>>, %arg4: memref<1x256xf32, #tpu.memory_space<vmem>>, %arg5: memref<16x256xf32, #tpu.memory_space<vmem>>, %arg6: memref<128x256xf32, #tpu.memory_space<vmem>>) attributes {dimension_semantics = [#tpu.dimension_semantics<parallel>, #tpu.dimension_semantics<arbitrary>], iteration_bounds = array<i64: 1, 1>, scalar_prefetch = 0 : i64, scratch_operands = 1 : i64, tpu.core_type = #tpu.core_type<tc>, window_params = [{transform_indices = @transform_0, window_bounds = array<i64: 16, 128>}, {transform_indices = @transform_1, window_bounds = array<i64: 256, 128>}, {transform_indices = @transform_2, window_bounds = array<i64: 1, 256>}, {transform_indices = @transform_3, window_bounds = array<i64: 16, 256>}]} {
    %c0_i32 = arith.constant 0 : i32
    %0 = arith.cmpi eq, %arg1, %c0_i32 : i32
    %1 = arith.extui %0 : i1 to i32
    %c0_i32_0 = arith.constant 0 : i32
    %2 = arith.cmpi ne, %1, %c0_i32_0 : i32
    scf.if %2 {
      %c0_9 = arith.constant 0 : index
      %c0_10 = arith.constant 0 : index
      %12 = vector.load %arg3[%c0_9, %c0_10] : memref<256x128xf32, #tpu.memory_space<vmem>>, vector<256x128xf32>
      %13 = tpu.transpose %12, [1, 0] : vector<256x128xf32> -> vector<128x256xf32>
      %c0_11 = arith.constant 0 : index
      %c0_12 = arith.constant 0 : index
      %14 = vector.load %arg6[%c0_11, %c0_12] : memref<128x256xf32, #tpu.memory_space<vmem>>, vector<128x256xf32>
      tpu.vector_store %arg6[%c0_11, %c0_12], %13 {strides = array<i32>} : memref<128x256xf32, #tpu.memory_space<vmem>>, vector<128x256xf32>,
    } else {
    }
    %c0 = arith.constant 0 : index
    %c0_1 = arith.constant 0 : index
    %3 = vector.load %arg2[%c0, %c0_1] : memref<16x128xf32, #tpu.memory_space<vmem>>, vector<16x128xf32>
    %c0_2 = arith.constant 0 : index
    %c0_3 = arith.constant 0 : index
    %4 = vector.load %arg6[%c0_2, %c0_3] : memref<128x256xf32, #tpu.memory_space<vmem>>, vector<128x256xf32>
    %cst = arith.constant dense<0.000000e+00> : vector<16x256xf32>
    %5 = tpu.matmul %3, %4, %cst {dimension_numbers = #tpu.dot_dimension_numbers<[1], [0], [0], [1], [0, 0, 1, 1], [], []>} : vector<16x128xf32>, vector<128x256xf32>, vector<16x256xf32> -> vector<16x256xf32>
    %c0_4 = arith.constant 0 : index
    %c0_5 = arith.constant 0 : index
    %6 = vector.load %arg4[%c0_4, %c0_5] : memref<1x256xf32, #tpu.memory_space<vmem>>, vector<1x256xf32>
    %7 = vector.broadcast %6 : vector<1x256xf32> to vector<16x256xf32>
    %8 = arith.addf %5, %7 : vector<16x256xf32>
    %cst_6 = arith.constant 5.000000e-01 : f32
    %9 = vector.broadcast %cst_6 : f32 to vector<16x256xf32>
    %10 = arith.mulf %9, %8 : vector<16x256xf32>
    %c0_7 = arith.constant 0 : index
    %c0_8 = arith.constant 0 : index
    %11 = vector.load %arg5[%c0_7, %c0_8] : memref<16x256xf32, #tpu.memory_space<vmem>>, vector<16x256xf32>
    tpu.vector_store %arg5[%c0_7, %c0_8], %10 {strides = array<i32>} : memref<16x256xf32, #tpu.memory_space<vmem>>, vector<16x256xf32>,
    return
  }
  func.func @transform_0(%arg0: i32, %arg1: i32) -> (i32, i32) {
    %c0_i32 = arith.constant 0 : i32
    %c0_i32_0 = arith.constant 0 : i32
    return %arg1, %c0_i32 : i32, i32
  }
  func.func @transform_1(%arg0: i32, %arg1: i32) -> (i32, i32) {
    %c0_i32 = arith.constant 0 : i32
    %c0_i32_0 = arith.constant 0 : i32
    return %arg0, %c0_i32 : i32, i32
  }
  func.func @transform_2(%arg0: i32, %arg1: i32) -> (i32, i32) {
    %c0_i32 = arith.constant 0 : i32
    %c0_i32_0 = arith.constant 0 : i32
    return %c0_i32, %arg0 : i32, i32
  }
  func.func @transform_3(%arg0: i32, %arg1: i32) -> (i32, i32) {
    %c0_i32 = arith.constant 0 : i32
    return %arg1, %arg0 : i32, i32
  }
}

</mosaic_0001>

<llo_original>
// kernel: tpu_custom_call.1
$region0: #{tpu_custom_call.1}
  #allocation0 [shape = 'u32[]', space=smem, size = 0x4, offset = 0x4, fixed_abs, tag = 'smem constant byte address 0x4 - core index']
  #allocation1 [shape = 'u32[144,128]{1,0:T(1,128)}', space=vmem, size = 0x12000, scoped, tag = 'internal scratch']
  #allocation2 [shape = 'f32[128,256]{1,0:T(8,128)}', space=vmem, size = 0x20000, scoped, tag = 'scratch operand']
  %s0 = inlined_call_operand.hbm [shape: f32[16,128], index: 0, kind: input, shape index: {}]
  %s1 = inlined_call_operand.hbm [shape: f32[256,128], index: 1, kind: input, shape index: {}]
  %s2 = inlined_call_operand.vmem [shape: f32[1,256], index: 2, kind: input, shape index: {}]
  %s3 = inlined_call_operand.hbm [shape: f32[16,256], index: 3, kind: output, shape index: {}]
  %s4 = sld [smem:[#allocation0]]
  $region34: #{tpu_custom_call.1} parent=0
    _
  %s6 = ssub.s32 1, %s4
  %s7 = scalar_select 0, %s6, %s4
  $region1: #{tpu_custom_call.1} parent=0
    #allocation3 [shape = 'u8[8192]{0}', space=vmem, size = 0x2000, scoped, tag = 'input window, operand 0, single buffered']
    #allocation4 [shape = 's32[1]{0}', space=sflag, size = 0x4, scoped, tag = 'scoped memory for tpu_custom_call.1']
    #allocation5 [shape = 's32[1]{0}', space=sflag, size = 0x4, scoped, tag = 'scoped memory for tpu_custom_call.1']
    #allocation6 [shape = 'u8[131072]{0}', space=vmem, size = 0x20000, scoped, tag = 'input window, operand 1, single buffered']
    #allocation7 [shape = 's32[1]{0}', space=sflag, size = 0x4, scoped, tag = 'scoped memory for tpu_custom_call.1']
    #allocation8 [shape = 'u8[16384]{0}', space=vmem, size = 0x4000, scoped, tag = 'output window, operand 0, single buffered']
    %8 = vsyncpa [#allocation4], 0
    %9 = vsyncpa [#allocation7], 0
    %10 = vsyncpa [#allocation5], 0
    // Predicated region
    $region2: #{tpu_custom_call.1} parent=1 // pred_check
      _
    $region3: #{tpu_custom_call.1} parent=1 // pred_check_branch
      %12 = sbr.rel (0) target = $region5
    $region4: #{tpu_custom_call.1} parent=1 // pred_region
      %s14 = ssub.s32 256, 256
      %15 = vsyncadd [#allocation4], %s14
      %s16 = sshll.u32 [#allocation3], 4
      %s17 = int_to_ptr.vmem [resolvable:$true] %s16
      %22 = dma.hbm_to_vmem [thread:$0]  %s0, 256, %s17, [#allocation4], 128, 128, 8
    $region5: #{tpu_custom_call.1} parent=1 // pred_fallthru
      _
    // Predicated region
    $region6: #{tpu_custom_call.1} parent=1 // pred_check
      _
    $region7: #{tpu_custom_call.1} parent=1 // pred_check_branch
      %24 = sbr.rel (0) target = $region9
    $region8: #{tpu_custom_call.1} parent=1 // pred_region
      %s26 = ssub.s32 4096, 4096
      %27 = vsyncadd [#allocation7], %s26
      %s28 = sshll.u32 [#allocation6], 4
      %s29 = int_to_ptr.vmem [resolvable:$true] %s28
      %34 = dma.hbm_to_vmem [thread:$0]  %s1, 4096, %s29, [#allocation7], 128, 128, 8
    $region9: #{tpu_custom_call.1} parent=1 // pred_fallthru
      _
    // Predicated region
    $region10: #{tpu_custom_call.1} parent=1 // pred_check
      _
    $region11: #{tpu_custom_call.1} parent=1 // pred_check_branch
      %36 = sbr.rel (0) target = $region13
    $region12: #{tpu_custom_call.1} parent=1 // pred_region
      _
    $region13: #{tpu_custom_call.1} parent=1 // pred_fallthru
      _
    // Predicated region
    $region14: #{tpu_custom_call.1} parent=1 // pred_check
      _
    $region15: #{tpu_custom_call.1} parent=1 // pred_check_branch
      %38 = sbr.rel (0) target = $region17
    $region16: #{tpu_custom_call.1} parent=1 // pred_region
      %39 = dma.done [#allocation4], 256
    $region17: #{tpu_custom_call.1} parent=1 // pred_fallthru
      _
    // Predicated region
    $region18: #{tpu_custom_call.1} parent=1 // pred_check
      _
    $region19: #{tpu_custom_call.1} parent=1 // pred_check_branch
      %41 = sbr.rel (0) target = $region21
    $region20: #{tpu_custom_call.1} parent=1 // pred_region
      %42 = dma.done [#allocation7], 4096
    $region21: #{tpu_custom_call.1} parent=1 // pred_fallthru
      _
    %p43 = scmp.eq.s32.totalorder 0, 0
    // Predicated region
    $region22: #{tpu_custom_call.1} parent=1 // pred_check
      %p44 = pneg %p43
    $region23: #{tpu_custom_call.1} parent=1 // pred_check_branch
      %46 = sbr.rel (%p44) target = $region25
    $region24: #{tpu_custom_call.1} parent=1 // pred_region
      %v47 = vld [vmem:[#allocation6] sm:$0xff]
      %v48 = vld [vmem:[#allocation6 + $0x8] sm:$0xff]
      %v49 = vld [vmem:[#allocation6 + $0x10] sm:$0xff]
      %v50 = vld [vmem:[#allocation6 + $0x18] sm:$0xff]
      %v51 = vld [vmem:[#allocation6 + $0x20] sm:$0xff]
      %v52 = vld [vmem:[#allocation6 + $0x28] sm:$0xff]
      %v53 = vld [vmem:[#allocation6 + $0x30] sm:$0xff]
      %v54 = vld [vmem:[#allocation6 + $0x38] sm:$0xff]
      %v55 = vld [vmem:[#allocation6 + $0x40] sm:$0xff]
      %v56 = vld [vmem:[#allocation6 + $0x48] sm:$0xff]
      %v57 = vld [vmem:[#allocation6 + $0x50] sm:$0xff]
      %v58 = vld [vmem:[#allocation6 + $0x58] sm:$0xff]
      %v59 = vld [vmem:[#allocation6 + $0x60] sm:$0xff]
      %v60 = vld [vmem:[#allocation6 + $0x68] sm:$0xff]
      %v61 = vld [vmem:[#allocation6 + $0x70] sm:$0xff]
      %v62 = vld [vmem:[#allocation6 + $0x78] sm:$0xff]
      %v63 = vld [vmem:[#allocation6 + $0x80] sm:$0xff]
      %v64 = vld [vmem:[#allocation6 + $0x88] sm:$0xff]
      %v65 = vld [vmem:[#allocation6 + $0x90] sm:$0xff]
      %v66 = vld [vmem:[#allocation6 + $0x98] sm:$0xff]
      %v67 = vld [vmem:[#allocation6 + $0xa0] sm:$0xff]
      %v68 = vld [vmem:[#allocation6 + $0xa8] sm:$0xff]
      %v69 = vld [vmem:[#allocation6 + $0xb0] sm:$0xff]
      %v70 = vld [vmem:[#allocation6 + $0xb8] sm:$0xff]
      %v71 = vld [vmem:[#allocation6 + $0xc0] sm:$0xff]
      %v72 = vld [vmem:[#allocation6 + $0xc8] sm:$0xff]
      %v73 = vld [vmem:[#allocation6 + $0xd0] sm:$0xff]
      %v74 = vld [vmem:[#allocation6 + $0xd8] sm:$0xff]
      %v75 = vld [vmem:[#allocation6 + $0xe0] sm:$0xff]
      %v76 = vld [vmem:[#allocation6 + $0xe8] sm:$0xff]
      %v77 = vld [vmem:[#allocation6 + $0xf0] sm:$0xff]
      %v78 = vld [vmem:[#allocation6 + $0xf8] sm:$0xff]
      %79 = vxpose.xlu0.b32.start [1/16] %v47, 128
      %80 = vxpose.xlu0.b32.cont [2/16] %v48, 128
      %81 = vxpose.xlu0.b32.cont [3/16] %v49, 128
      %82 = vxpose.xlu0.b32.cont [4/16] %v50, 128
      %83 = vxpose.xlu0.b32.cont [5/16] %v51, 128
      %84 = vxpose.xlu0.b32.cont [6/16] %v52, 128
      %85 = vxpose.xlu0.b32.cont [7/16] %v53, 128
      %86 = vxpose.xlu0.b32.cont [8/16] %v54, 128
      %87 = vxpose.xlu0.b32.cont [9/16] %v55, 128
      %88 = vxpose.xlu0.b32.cont [10/16] %v56, 128
      %89 = vxpose.xlu0.b32.cont [11/16] %v57, 128
      %90 = vxpose.xlu0.b32.cont [12/16] %v58, 128
      %91 = vxpose.xlu0.b32.cont [13/16] %v59, 128
      %92 = vxpose.xlu0.b32.cont [14/16] %v60, 128
      %93 = vxpose.xlu0.b32.cont [15/16] %v61, 128
      %94 = vxpose.xlu0.b32.end [16/16] %v62, 128
      %v95 = vpop.trf.xlu0
      %v96 = vpop.trf.xlu0
      %v97 = vpop.trf.xlu0
      %v98 = vpop.trf.xlu0
      %v99 = vpop.trf.xlu0
      %v100 = vpop.trf.xlu0
      %v101 = vpop.trf.xlu0
      %v102 = vpop.trf.xlu0
      %v103 = vpop.trf.xlu0
      %v104 = vpop.trf.xlu0
      %v105 = vpop.trf.xlu0
      %v106 = vpop.trf.xlu0
      %v107 = vpop.trf.xlu0
      %v108 = vpop.trf.xlu0
      %v109 = vpop.trf.xlu0
      %v110 = vpop.trf.xlu0
      %111 = vxpose.xlu0.b32.start [1/16] %v63, 128
      %112 = vxpose.xlu0.b32.cont [2/16] %v64, 128
      %113 = vxpose.xlu0.b32.cont [3/16] %v65, 128
      %114 = vxpose.xlu0.b32.cont [4/16] %v66, 128
      %115 = vxpose.xlu0.b32.cont [5/16] %v67, 128
      %116 = vxpose.xlu0.b32.cont [6/16] %v68, 128
      %117 = vxpose.xlu0.b32.cont [7/16] %v69, 128
      %118 = vxpose.xlu0.b32.cont [8/16] %v70, 128
      %119 = vxpose.xlu0.b32.cont [9/16] %v71, 128
      %120 = vxpose.xlu0.b32.cont [10/16] %v72, 128
      %121 = vxpose.xlu0.b32.cont [11/16] %v73, 128
      %122 = vxpose.xlu0.b32.cont [12/16] %v74, 128
      %123 = vxpose.xlu0.b32.cont [13/16] %v75, 128
      %124 = vxpose.xlu0.b32.cont [14/16] %v76, 128
      %125 = vxpose.xlu0.b32.cont [15/16] %v77, 128
      %126 = vxpose.xlu0.b32.end [16/16] %v78, 128
      %v127 = vpop.trf.xlu0
      %v128 = vpop.trf.xlu0
      %v129 = vpop.trf.xlu0
      %v130 = vpop.trf.xlu0
      %v131 = vpop.trf.xlu0
      %v132 = vpop.trf.xlu0
      %v133 = vpop.trf.xlu0
      %v134 = vpop.trf.xlu0
      %v135 = vpop.trf.xlu0
      %v136 = vpop.trf.xlu0
      %v137 = vpop.trf.xlu0
      %v138 = vpop.trf.xlu0
      %v139 = vpop.trf.xlu0
      %v140 = vpop.trf.xlu0
      %v141 = vpop.trf.xlu0
      %v142 = vpop.trf.xlu0
      %143 = vst [vmem:[#allocation2] sm:$0xff] %v95
      %144 = vst [vmem:[#allocation2 + $0x8] sm:$0xff] %v127
      %145 = vst [vmem:[#allocation2 + $0x10] sm:$0xff] %v96
      %146 = vst [vmem:[#allocation2 + $0x18] sm:$0xff] %v128
      %147 = vst [vmem:[#allocation2 + $0x20] sm:$0xff] %v97
      %148 = vst [vmem:[#allocation2 + $0x28] sm:$0xff] %v129
      %149 = vst [vmem:[#allocation2 + $0x30] sm:$0xff] %v98
      %150 = vst [vmem:[#allocation2 + $0x38] sm:$0xff] %v130
      %151 = vst [vmem:[#allocation2 + $0x40] sm:$0xff] %v99
      %152 = vst [vmem:[#allocation2 + $0x48] sm:$0xff] %v131
      %153 = vst [vmem:[#allocation2 + $0x50] sm:$0xff] %v100
      %154 = vst [vmem:[#allocation2 + $0x58] sm:$0xff] %v132
      %155 = vst [vmem:[#allocation2 + $0x60] sm:$0xff] %v101
      %156 = vst [vmem:[#allocation2 + $0x68] sm:$0xff] %v133
      %157 = vst [vmem:[#allocation2 + $0x70] sm:$0xff] %v102
      %158 = vst [vmem:[#allocation2 + $0x78] sm:$0xff] %v134
      %159 = vst [vmem:[#allocation2 + $0x80] sm:$0xff] %v103
      %160 = vst [vmem:[#allocation2 + $0x88] sm:$0xff] %v135
      %161 = vst [vmem:[#allocation2 + $0x90] sm:$0xff] %v104
      %162 = vst [vmem:[#allocation2 + $0x98] sm:$0xff] %v136
      %163 = vst [vmem:[#allocation2 + $0xa0] sm:$0xff] %v105
      %164 = vst [vmem:[#allocation2 + $0xa8] sm:$0xff] %v137
      %165 = vst [vmem:[#allocation2 + $0xb0] sm:$0xff] %v106
      %166 = vst [vmem:[#allocation2 + $0xb8] sm:$0xff] %v138
      %167 = vst [vmem:[#allocation2 + $0xc0] sm:$0xff] %v107
      %168 = vst [vmem:[#allocation2 + $0xc8] sm:$0xff] %v139
      %169 = vst [vmem:[#allocation2 + $0xd0] sm:$0xff] %v108
      %170 = vst [vmem:[#allocation2 + $0xd8] sm:$0xff] %v140
      %171 = vst [vmem:[#allocation2 + $0xe0] sm:$0xff] %v109
      %172 = vst [vmem:[#allocation2 + $0xe8] sm:$0xff] %v141
      %173 = vst [vmem:[#allocation2 + $0xf0] sm:$0xff] %v110
      %174 = vst [vmem:[#allocation2 + $0xf8] sm:$0xff] %v142
    $region25: #{tpu_custom_call.1} parent=1 // pred_fallthru
      _
    %v175 = vld [vmem:[#allocation3] sm:$0xff]
    %v176 = vld [vmem:[#allocation3 + $0x8] sm:$0xff]
    %v177 = vld [vmem:[#allocation2] sm:$0xff]
    %v178 = vld [vmem:[#allocation2 + $0x8] sm:$0xff]
    %v179 = vld [vmem:[#allocation2 + $0x10] sm:$0xff]
    %v180 = vld [vmem:[#allocation2 + $0x18] sm:$0xff]
    %v181 = vld [vmem:[#allocation2 + $0x20] sm:$0xff]
    %v182 = vld [vmem:[#allocation2 + $0x28] sm:$0xff]
    %v183 = vld [vmem:[#allocation2 + $0x30] sm:$0xff]
    %v184 = vld [vmem:[#allocation2 + $0x38] sm:$0xff]
    %v185 = vld [vmem:[#allocation2 + $0x40] sm:$0xff]
    %v186 = vld [vmem:[#allocation2 + $0x48] sm:$0xff]
    %v187 = vld [vmem:[#allocation2 + $0x50] sm:$0xff]
    %v188 = vld [vmem:[#allocation2 + $0x58] sm:$0xff]
    %v189 = vld [vmem:[#allocation2 + $0x60] sm:$0xff]
    %v190 = vld [vmem:[#allocation2 + $0x68] sm:$0xff]
    %v191 = vld [vmem:[#allocation2 + $0x70] sm:$0xff]
    %v192 = vld [vmem:[#allocation2 + $0x78] sm:$0xff]
    %v193 = vld [vmem:[#allocation2 + $0x80] sm:$0xff]
    %v194 = vld [vmem:[#allocation2 + $0x88] sm:$0xff]
    %v195 = vld [vmem:[#allocation2 + $0x90] sm:$0xff]
    %v196 = vld [vmem:[#allocation2 + $0x98] sm:$0xff]
    %v197 = vld [vmem:[#allocation2 + $0xa0] sm:$0xff]
    %v198 = vld [vmem:[#allocation2 + $0xa8] sm:$0xff]
    %v199 = vld [vmem:[#allocation2 + $0xb0] sm:$0xff]
    %v200 = vld [vmem:[#allocation2 + $0xb8] sm:$0xff]
    %v201 = vld [vmem:[#allocation2 + $0xc0] sm:$0xff]
    %v202 = vld [vmem:[#allocation2 + $0xc8] sm:$0xff]
    %v203 = vld [vmem:[#allocation2 + $0xd0] sm:$0xff]
    %v204 = vld [vmem:[#allocation2 + $0xd8] sm:$0xff]
    %v205 = vld [vmem:[#allocation2 + $0xe0] sm:$0xff]
    %v206 = vld [vmem:[#allocation2 + $0xe8] sm:$0xff]
    %v207 = vld [vmem:[#allocation2 + $0xf0] sm:$0xff]
    %v208 = vld [vmem:[#allocation2 + $0xf8] sm:$0xff]
    %v209 = vld [vmem:[%s2] sm:$0x3]
    %v211 = vlaneseq
    %v212 = vshrl.u32 %v211, 7
    %v213 = vsub.s32 0, %v212
    %v214 = vrot.slane %v209, %v213
    %v215 = vlaneseq
    %v216 = vshrl.u32 %v215, 7
    %v217 = vsub.s32 1, %v216
    %v218 = vrot.slane %v209, %v217
    %221 = vmatprep.subr.mxu0 %v178
    %222 = vmatpush1.msra.mxu0 %v177
    %223 = vmatprep.subr.mxu0 %v180
    %224 = vmatpush1.msra.mxu0 %v179
    %225 = vmatprep.subr.mxu0 %v182
    %226 = vmatpush1.msra.mxu0 %v181
    %227 = vmatprep.subr.mxu0 %v184
    %228 = vmatpush1.msra.mxu0 %v183
    %229 = vmatprep.subr.mxu0 %v186
    %230 = vmatpush1.msra.mxu0 %v185
    %231 = vmatprep.subr.mxu0 %v188
    %232 = vmatpush1.msra.mxu0 %v187
    %233 = vmatprep.subr.mxu0 %v190
    %234 = vmatpush1.msra.mxu0 %v189
    %235 = vmatprep.subr.mxu0 %v192
    %236 = vmatpush1.msra.mxu0 %v191
    %237 = vmatprep.subr.mxu0 %v194
    %238 = vmatpush1.msra.mxu0 %v193
    %239 = vmatprep.subr.mxu0 %v196
    %240 = vmatpush1.msra.mxu0 %v195
    %241 = vmatprep.subr.mxu0 %v198
    %242 = vmatpush1.msra.mxu0 %v197
    %243 = vmatprep.subr.mxu0 %v200
    %244 = vmatpush1.msra.mxu0 %v199
    %245 = vmatprep.subr.mxu0 %v202
    %246 = vmatpush1.msra.mxu0 %v201
    %247 = vmatprep.subr.mxu0 %v204
    %248 = vmatpush1.msra.mxu0 %v203
    %249 = vmatprep.subr.mxu0 %v206
    %250 = vmatpush1.msra.mxu0 %v205
    %251 = vmatprep.subr.mxu0 %v208
    %252 = vmatpush1.msra.mxu0 %v207
    %253 = vmatprep.subr.mxu0 0.0
    %254 = vmatpush1.msra.mxu0 0.0
    %255 = vmatprep.subr.mxu0 0.0
    %256 = vmatpush1.msra.mxu0 0.0
    %257 = vmatprep.subr.mxu0 0.0
    %258 = vmatpush1.msra.mxu0 0.0
    %259 = vmatprep.subr.mxu0 0.0
    %260 = vmatpush1.msra.mxu0 0.0
    %261 = vmatprep.subr.mxu0 0.0
    %262 = vmatpush1.msra.mxu0 0.0
    %263 = vmatprep.subr.mxu0 0.0
    %264 = vmatpush1.msra.mxu0 0.0
    %265 = vmatprep.subr.mxu0 0.0
    %266 = vmatpush1.msra.mxu0 0.0
    %267 = vmatprep.subr.mxu0 0.0
    %268 = vmatpush1.msra.mxu0 0.0
    %269 = vmatprep.subr.mxu0 0.0
    %270 = vmatpush1.msra.mxu0 0.0
    %271 = vmatprep.subr.mxu0 0.0
    %272 = vmatpush1.msra.mxu0 0.0
    %273 = vmatprep.subr.mxu0 0.0
    %274 = vmatpush1.msra.mxu0 0.0
    %275 = vmatprep.subr.mxu0 0.0
    %276 = vmatpush1.msra.mxu0 0.0
    %277 = vmatprep.subr.mxu0 0.0
    %278 = vmatpush1.msra.mxu0 0.0
    %279 = vmatprep.subr.mxu0 0.0
    %280 = vmatpush1.msra.mxu0 0.0
    %281 = vmatprep.subr.mxu0 0.0
    %282 = vmatpush1.msra.mxu0 0.0
    %283 = vmatprep.subr.mxu0 0.0
    %284 = vmatpush1.msra.mxu0 0.0
    %285 = vmatprep.mubr.f32.mxu0 0.0
    %286 = vmatmul.mubr.f32.gmra.mrb[0].mxu0 %v175
    %v287 = vpop.f32.mrb[0].mxu0
    %v288 = vadd.f32 %v214, %v287
    %v289 = vpop.f32.mrb[0].mxu0
    %v290 = vadd.f32 %v218, %v289
    %291 = vmatprep.mubr.f32.mxu0 0.0
    %292 = vmatmul.mubr.f32.gmra.mrb[0].mxu0 %v176
    %v293 = vpop.f32.mrb[0].mxu0
    %v294 = vadd.f32 %v214, %v293
    %v295 = vpop.f32.mrb[0].mxu0
    %v296 = vadd.f32 %v218, %v295
    %297 = vdwg.mxu0
    %v298 = vmul.f32 %v288, 0.5
    %v299 = vmul.f32 %v290, 0.5
    %v300 = vmul.f32 %v294, 0.5
    %v301 = vmul.f32 %v296, 0.5
    %302 = vst [vmem:[#allocation8] sm:$0xff] %v298
    %303 = vst [vmem:[#allocation8 + $0x8] sm:$0xff] %v299
    %304 = vst [vmem:[#allocation8 + $0x10] sm:$0xff] %v300
    %305 = vst [vmem:[#allocation8 + $0x18] sm:$0xff] %v301
    // Predicated region
    $region26: #{tpu_custom_call.1} parent=1 // pred_check
      _
    $region27: #{tpu_custom_call.1} parent=1 // pred_check_branch
      %307 = sbr.rel (0) target = $region29
    $region28: #{tpu_custom_call.1} parent=1 // pred_region
      %s309 = ssub.s32 512, 512
      %310 = vsyncadd [#allocation5], %s309
      %s311 = sshll.u32 [#allocation8], 4
      %s312 = int_to_ptr.vmem [resolvable:$true] %s311
      %317 = dma.vmem_to_hbm [thread:$0]  %s312, 512, %s3, [#allocation5], 256, 256, 16
    $region29: #{tpu_custom_call.1} parent=1 // pred_fallthru
      _
    // Predicated region
    $region30: #{tpu_custom_call.1} parent=1 // pred_check
      _
    $region31: #{tpu_custom_call.1} parent=1 // pred_check_branch
      %319 = sbr.rel (0) target = $region33
    $region32: #{tpu_custom_call.1} parent=1 // pred_region
      %320 = dma.done [#allocation5], 512
    $region33: #{tpu_custom_call.1} parent=1 // pred_fallthru
      _
    %321 = vsyncpa [#allocation4], 1
    %322 = vsyncpa [#allocation7], 1
    %323 = vsyncpa [#allocation5], 1

</llo_original>
